<compile_context>
chip_gen: v7x
topology: tpu7x:2x2x1
jax: 0.10.0
libtpu: 0.0.40
codegen_flags: <defaults>
</compile_context>

<pallas_src>
import functools
import math

import jax
import jax.numpy as jnp
from jax.experimental import pallas as pl
from jax.experimental.pallas import tpu as pltpu


_VMEM_LIMIT_BYTES = 48 * 1024 * 1024  # explicit scoped-VMEM budget (< v7x 64 MiB)


def _cparams(semantics):
    return pltpu.CompilerParams(dimension_semantics=semantics,
                                vmem_limit_bytes=_VMEM_LIMIT_BYTES)


def _pick_tile(n, candidates):
    for t in candidates:
        if n % t == 0:
            return t
    return n  # small case: full extent


# ---------------------------------------------------------------------------
# In-kernel helpers (f32 math)
# ---------------------------------------------------------------------------
def _layernorm(x, w, b, eps=1e-12):
    # Matches the PyTorch LayerNorm in the reference (biased variance).
    u = jnp.mean(x, axis=-1, keepdims=True)
    xc = x - u
    s = jnp.mean(xc * xc, axis=-1, keepdims=True)
    return w * (xc * jax.lax.rsqrt(s + eps)) + b


def _gelu_exact(x):
    # nn.GELU / F.gelu default = exact erf-based gelu.
    return 0.5 * x * (1.0 + jax.lax.erf(x / jnp.sqrt(jnp.float32(2.0))))


# ---------------------------------------------------------------------------
# Kernel 1: embedding sum + LayerNorm, row-tiled over flattened tokens
# ---------------------------------------------------------------------------
def embed_ln_kernel(we_ref, pe_ref, te_ref, w_ref, b_ref, o_ref):
    x = we_ref[...] + pe_ref[...] + te_ref[...]
    o_ref[...] = _layernorm(x, w_ref[...], b_ref[...])


def embed_ln_call(we, pe, te, ln_w, ln_b):
    M, H = we.shape
    tm = _pick_tile(M, (256, 128))
    row = pl.BlockSpec((tm, H), lambda m: (m, 0))
    vec = pl.BlockSpec((1, H), lambda m: (0, 0))
    return pl.pallas_call(
        embed_ln_kernel,
        grid=(M // tm,),
        in_specs=[row, row, row, vec, vec],
        out_specs=row,
        out_shape=jax.ShapeDtypeStruct((M, H), jnp.float32),
        compiler_params=_cparams(("parallel",)),
    )(we, pe, te, ln_w, ln_b)


# ---------------------------------------------------------------------------
# Kernel 2: fused Q/K/V projection, row-tiled (bf16 weights, f32 accumulate)
# ---------------------------------------------------------------------------
def qkv_kernel(x_ref, wq_ref, bq_ref, wk_ref, bk_ref, wv_ref, bv_ref,
               q_ref, k_ref, v_ref):
    xb = x_ref[...].astype(jnp.bfloat16)
    q_ref[...] = jnp.dot(xb, wq_ref[...],
                         preferred_element_type=jnp.float32) + bq_ref[...]
    k_ref[...] = jnp.dot(xb, wk_ref[...],
                         preferred_element_type=jnp.float32) + bk_ref[...]
    v_ref[...] = jnp.dot(xb, wv_ref[...],
                         preferred_element_type=jnp.float32) + bv_ref[...]


def qkv_call(x, lp):
    M, H = x.shape
    tm = _pick_tile(M, (256, 128))
    row = pl.BlockSpec((tm, H), lambda m: (m, 0))
    wmat = pl.BlockSpec((H, H), lambda m: (0, 0))
    vec = pl.BlockSpec((1, H), lambda m: (0, 0))
    out = jax.ShapeDtypeStruct((M, H), jnp.float32)
    return pl.pallas_call(
        qkv_kernel,
        grid=(M // tm,),
        in_specs=[row, wmat, vec, wmat, vec, wmat, vec],
        out_specs=[row, row, row],
        out_shape=[out, out, out],
        compiler_params=_cparams(("parallel",)),
    )(x, lp["wq"], lp["bq"], lp["wk"], lp["bk"], lp["wv"], lp["bv"])


# ---------------------------------------------------------------------------
# Kernel 3: batched-head self-attention (one batch element per grid step)
# ---------------------------------------------------------------------------
def attention_kernel(q_ref, k_ref, v_ref, mask_ref, o_ref, *, num_heads, head_dim):
    S = q_ref.shape[1]
    scale = 1.0 / math.sqrt(head_dim)

    def split_heads(x2d):
        # (S, H) f32 -> (num_heads, S, head_dim)
        return jnp.transpose(x2d.reshape(S, num_heads, head_dim), (1, 0, 2))

    q = split_heads(q_ref[0] * scale)          # scale folded into q once
    k = split_heads(k_ref[0])
    v = split_heads(v_ref[0])

    # scores: (nh, S_q, S_k), batched over heads on the MXU
    sc = jnp.einsum('hqd,hkd->hqk', q.astype(jnp.bfloat16), k.astype(jnp.bfloat16),
                    preferred_element_type=jnp.float32)
    sc = sc + mask_ref[...].reshape(1, 1, S)   # additive key mask, added once
    sc = sc - jnp.max(sc, axis=-1, keepdims=True)
    p = jnp.exp(sc)
    p = p * pl.reciprocal(jnp.sum(p, axis=-1, keepdims=True), approx=True)

    ctx = jnp.einsum('hqk,hkd->hqd', p.astype(jnp.bfloat16), v.astype(jnp.bfloat16),
                     preferred_element_type=jnp.float32)
    o_ref[0] = jnp.transpose(ctx, (1, 0, 2)).reshape(S, num_heads * head_dim)


def attention_call(q, k, v, ext_mask, num_heads):
    # TODO(synk): for S >= 512, tile over query blocks (flash-style online
    # softmax) instead of materializing full (nh, S, S) scores per batch.
    B, S, H = q.shape
    act = pl.BlockSpec((1, S, H), lambda b: (b, 0, 0))
    msk = pl.BlockSpec((1, S), lambda b: (b, 0))
    kernel = functools.partial(attention_kernel,
                               num_heads=num_heads, head_dim=H // num_heads)
    return pl.pallas_call(
        kernel,
        grid=(B,),
        in_specs=[act, act, act, msk],
        out_specs=act,
        out_shape=jax.ShapeDtypeStruct((B, S, H), jnp.float32),
        compiler_params=_cparams(("parallel",)),
    )(q, k, v, ext_mask)


# ---------------------------------------------------------------------------
# Kernel 4: attention output projection + residual + LayerNorm, row-tiled
# ---------------------------------------------------------------------------
def attn_out_ln_kernel(ctx_ref, x_ref, wo_ref, bo_ref, lnw_ref, lnb_ref, o_ref):
    attn = jnp.dot(ctx_ref[...].astype(jnp.bfloat16), wo_ref[...],
                   preferred_element_type=jnp.float32) + bo_ref[...]
    o_ref[...] = _layernorm(attn + x_ref[...], lnw_ref[...], lnb_ref[...])


def attn_out_ln_call(ctx, x, lp):
    M, H = x.shape
    tm = _pick_tile(M, (256, 128))
    row = pl.BlockSpec((tm, H), lambda m: (m, 0))
    wmat = pl.BlockSpec((H, H), lambda m: (0, 0))
    vec = pl.BlockSpec((1, H), lambda m: (0, 0))
    return pl.pallas_call(
        attn_out_ln_kernel,
        grid=(M // tm,),
        in_specs=[row, row, wmat, vec, vec, vec],
        out_specs=row,
        out_shape=jax.ShapeDtypeStruct((M, H), jnp.float32),
        compiler_params=_cparams(("parallel",)),
    )(ctx, x, lp["wo"], lp["bo"], lp["ln1_w"], lp["ln1_b"])


# ---------------------------------------------------------------------------
# Kernel 5: FFN (dense1+GELU, dense2) tiled over the intermediate dim with an
# f32 VMEM accumulator, then residual + LayerNorm at the last I tile.
# ---------------------------------------------------------------------------
def ffn_ln_kernel(h_ref, w1_ref, b1_ref, w2_ref, b2_ref, lnw_ref, lnb_ref,
                  o_ref, acc_ref):
    i = pl.program_id(1)

    @pl.when(i == 0)
    def _():
        acc_ref[...] = jnp.zeros_like(acc_ref)

    hb = h_ref[...].astype(jnp.bfloat16)
    ff = jnp.dot(hb, w1_ref[...], preferred_element_type=jnp.float32) + b1_ref[...]
    ff = _gelu_exact(ff)
    acc_ref[...] += jnp.dot(ff.astype(jnp.bfloat16), w2_ref[...],
                            preferred_element_type=jnp.float32)

    @pl.when(i == pl.num_programs(1) - 1)
    def _():
        o_ref[...] = _layernorm(acc_ref[...] + b2_ref[...] + h_ref[...],
                                lnw_ref[...], lnb_ref[...])


def ffn_ln_call(h1, lp):
    M, H = h1.shape
    I = lp["w1"].shape[1]
    tm = _pick_tile(M, (256, 128))
    ti = _pick_tile(I, (512, 256, 128))
    row = pl.BlockSpec((tm, H), lambda m, i: (m, 0))
    w1s = pl.BlockSpec((H, ti), lambda m, i: (0, i))
    b1s = pl.BlockSpec((1, ti), lambda m, i: (0, i))
    w2s = pl.BlockSpec((ti, H), lambda m, i: (i, 0))
    vec = pl.BlockSpec((1, H), lambda m, i: (0, 0))
    return pl.pallas_call(
        ffn_ln_kernel,
        grid=(M // tm, I // ti),
        in_specs=[row, w1s, b1s, w2s, vec, vec, vec],
        out_specs=row,
        out_shape=jax.ShapeDtypeStruct((M, H), jnp.float32),
        scratch_shapes=[pltpu.VMEM((tm, H), jnp.float32)],
        compiler_params=_cparams(("parallel", "arbitrary")),
    )(h1, lp["w1"], lp["b1"], lp["w2"], lp["b2"], lp["ln2_w"], lp["ln2_b"])


# ---------------------------------------------------------------------------
# Kernels 6/7: MLM cls head = Linear(H,H) + GELU + LayerNorm, then
# Linear(H, vocab_padded) tiled over (rows, vocab) with lane-dense output.
# ---------------------------------------------------------------------------
def cls_transform_kernel(x_ref, w_ref, b_ref, lnw_ref, lnb_ref, o_ref):
    h = jnp.dot(x_ref[...].astype(jnp.bfloat16), w_ref[...],
                preferred_element_type=jnp.float32) + b_ref[...]
    o_ref[...] = _layernorm(_gelu_exact(h), lnw_ref[...], lnb_ref[...])


def cls_transform_call(x, w, b, ln_w, ln_b):
    M, H = x.shape
    tm = _pick_tile(M, (256, 128))
    row = pl.BlockSpec((tm, H), lambda m: (m, 0))
    wmat = pl.BlockSpec((H, H), lambda m: (0, 0))
    vec = pl.BlockSpec((1, H), lambda m: (0, 0))
    return pl.pallas_call(
        cls_transform_kernel,
        grid=(M // tm,),
        in_specs=[row, wmat, vec, vec, vec],
        out_specs=row,
        out_shape=jax.ShapeDtypeStruct((M, H), jnp.float32),
        compiler_params=_cparams(("parallel",)),
    )(x, w, b, ln_w, ln_b)


def cls_decoder_kernel(x_ref, w_ref, b_ref, o_ref):
    o_ref[...] = jnp.dot(x_ref[...].astype(jnp.bfloat16), w_ref[...],
                         preferred_element_type=jnp.float32) + b_ref[...]


def cls_decoder_call(x, w, b):
    M, H = x.shape
    Vp = w.shape[1]
    tm = _pick_tile(M, (256, 128))
    tv = _pick_tile(Vp, (512, 256, 128))
    row = pl.BlockSpec((tm, H), lambda m, v: (m, 0))
    ws = pl.BlockSpec((H, tv), lambda m, v: (0, v))
    bs = pl.BlockSpec((1, tv), lambda m, v: (0, v))
    outs = pl.BlockSpec((tm, tv), lambda m, v: (m, v))
    return pl.pallas_call(
        cls_decoder_kernel,
        grid=(M // tm, Vp // tv),
        in_specs=[row, ws, bs],
        out_specs=outs,
        out_shape=jax.ShapeDtypeStruct((M, Vp), jnp.float32),
        compiler_params=_cparams(("parallel", "parallel")),
    )(x, w, b)


# ---------------------------------------------------------------------------
# Parameter init (deterministic; matches shapes of the PyTorch module).
# Matmul weights in bf16; biases / LayerNorm params / embeddings in f32.
# ---------------------------------------------------------------------------
def init_params(key, vocab_size, hidden, num_layers, intermediate,
                max_pos, type_vocab):
    n_keys = 3 + num_layers * 6 + 2
    keys = iter(jax.random.split(key, n_keys))
    std = 0.02

    def normal(shape, dtype=jnp.float32):
        return (std * jax.random.normal(next(keys), shape)).astype(dtype)

    vpad = ((vocab_size + 127) // 128) * 128

    params = {
        "vocab_size": vocab_size,
        "word_emb": normal((vocab_size, hidden)),
        "pos_emb": normal((max_pos, hidden)),
        "type_emb": normal((type_vocab, hidden)),
        "emb_ln_w": jnp.ones((1, hidden), jnp.float32),
        "emb_ln_b": jnp.zeros((1, hidden), jnp.float32),
        "layers": [],
    }
    for _ in range(num_layers):
        layer = {
            "wq": normal((hidden, hidden), jnp.bfloat16),
            "bq": jnp.zeros((1, hidden), jnp.float32),
            "wk": normal((hidden, hidden), jnp.bfloat16),
            "bk": jnp.zeros((1, hidden), jnp.float32),
            "wv": normal((hidden, hidden), jnp.bfloat16),
            "bv": jnp.zeros((1, hidden), jnp.float32),
            "wo": normal((hidden, hidden), jnp.bfloat16),
            "bo": jnp.zeros((1, hidden), jnp.float32),
            "ln1_w": jnp.ones((1, hidden), jnp.float32),
            "ln1_b": jnp.zeros((1, hidden), jnp.float32),
            "w1": normal((hidden, intermediate), jnp.bfloat16),
            "b1": jnp.zeros((1, intermediate), jnp.float32),
            "w2": normal((intermediate, hidden), jnp.bfloat16),
            "b2": jnp.zeros((1, hidden), jnp.float32),
            "ln2_w": jnp.ones((1, hidden), jnp.float32),
            "ln2_b": jnp.zeros((1, hidden), jnp.float32),
        }
        params["layers"].append(layer)

    # MLM cls head: Linear(H,H) -> GELU -> LayerNorm -> Linear(H, vocab)
    params["cls_w"] = normal((hidden, hidden), jnp.bfloat16)
    params["cls_b"] = jnp.zeros((1, hidden), jnp.float32)
    params["cls_ln_w"] = jnp.ones((1, hidden), jnp.float32)
    params["cls_ln_b"] = jnp.zeros((1, hidden), jnp.float32)
    dec = normal((hidden, vocab_size), jnp.float32)
    params["cls_dec_w"] = jnp.pad(dec, ((0, 0), (0, vpad - vocab_size))
                                  ).astype(jnp.bfloat16)
    params["cls_dec_b"] = jnp.zeros((1, vpad), jnp.float32)
    return params


# ---------------------------------------------------------------------------
# BERT forward (gathers/reshapes in glue JAX, hot path in Pallas)
# ---------------------------------------------------------------------------
def bert_forward(params, input_ids, token_type_ids=None, attention_mask=None,
                 num_heads=4):
    B, S = input_ids.shape
    H = params["word_emb"].shape[1]
    M = B * S
    V = params["vocab_size"]

    if token_type_ids is None:
        token_type_ids = jnp.zeros_like(input_ids)

    flat_ids = input_ids.reshape(M)
    flat_types = token_type_ids.reshape(M)
    flat_pos = jnp.tile(jnp.arange(S, dtype=jnp.int32), B)

    # Embedding-table gathers stay in glue JAX (data-dependent HBM gather).
    we = jnp.take(params["word_emb"], flat_ids, axis=0)       # (M, H)
    pe = jnp.take(params["pos_emb"], flat_pos, axis=0)
    te = jnp.take(params["type_emb"], flat_types, axis=0)

    if attention_mask is not None:
        ext_mask = (1.0 - attention_mask.astype(jnp.float32)) * -10000.0  # (B,S)
    else:
        ext_mask = jnp.zeros((B, S), jnp.float32)

    x = embed_ln_call(we, pe, te, params["emb_ln_w"], params["emb_ln_b"])  # (M,H)

    for lp in params["layers"]:
        q, k, v = qkv_call(x, lp)                                          # (M,H)
        ctx = attention_call(q.reshape(B, S, H), k.reshape(B, S, H),
                             v.reshape(B, S, H), ext_mask, num_heads)      # (B,S,H)
        h1 = attn_out_ln_call(ctx.reshape(M, H), x, lp)                    # (M,H)
        x = ffn_ln_call(h1, lp)                                            # (M,H)

    # BertForMaskedLM cls head -> prediction scores
    t = cls_transform_call(x, params["cls_w"], params["cls_b"],
                           params["cls_ln_w"], params["cls_ln_b"])         # (M,H)
    logits_p = cls_decoder_call(t, params["cls_dec_w"], params["cls_dec_b"])
    return logits_p[:, :V].reshape(B, S, V)


# ---------------------------------------------------------------------------
if __name__ == "__main__":
    VOCAB = 100
    HIDDEN = 128
    NUM_LAYERS = 2
    NUM_HEADS = 4
    INTERMEDIATE = 256
    MAX_POS = 512
    TYPE_VOCAB = 2
    B, S = 2, 16

    key = jax.random.PRNGKey(0)
    k_params, k_ids = jax.random.split(key)

    params = init_params(k_params, VOCAB, HIDDEN, NUM_LAYERS,
                         INTERMEDIATE, MAX_POS, TYPE_VOCAB)

    input_ids = jax.random.randint(k_ids, (B, S), 0, VOCAB, dtype=jnp.int32)
    token_type_ids = jnp.zeros((B, S), jnp.int32)
    # last 4 positions of batch element 1 are padding
    attention_mask = jnp.ones((B, S), jnp.float32).at[1, -4:].set(0.0)

    out = bert_forward(params, input_ids, token_type_ids, attention_mask,
                       num_heads=NUM_HEADS)
    out = jax.block_until_ready(out)

    assert out.shape == (B, S, VOCAB)
    assert jnp.all(jnp.isfinite(out))
    print("KERNEL_OK")
</pallas_src>

<mosaic_0001>
module attributes {stable_mosaic.version = 11 : i64} {
  func.func @embed_ln_kernel(%arg0: i32, %arg1: memref<32x128xf32, #tpu.memory_space<vmem>>, %arg2: memref<32x128xf32, #tpu.memory_space<vmem>>, %arg3: memref<32x128xf32, #tpu.memory_space<vmem>>, %arg4: memref<1x128xf32, #tpu.memory_space<vmem>>, %arg5: memref<1x128xf32, #tpu.memory_space<vmem>>, %arg6: memref<32x128xf32, #tpu.memory_space<vmem>>) attributes {dimension_semantics = [#tpu.dimension_semantics<parallel>], iteration_bounds = array<i64: 1>, scalar_prefetch = 0 : i64, scratch_operands = 0 : i64, tpu.core_type = #tpu.core_type<tc>, window_params = [{transform_indices = @transform_0, window_bounds = array<i64: 32, 128>}, {transform_indices = @transform_1, window_bounds = array<i64: 32, 128>}, {transform_indices = @transform_2, window_bounds = array<i64: 32, 128>}, {pipeline_mode = #tpu.pipeline_mode<synchronous>, transform_indices = @transform_3, window_bounds = array<i64: 1, 128>}, {pipeline_mode = #tpu.pipeline_mode<synchronous>, transform_indices = @transform_4, window_bounds = array<i64: 1, 128>}, {transform_indices = @transform_5, window_bounds = array<i64: 32, 128>}]} {
    %c0 = arith.constant 0 : index
    %c0_0 = arith.constant 0 : index
    %0 = vector.load %arg1[%c0, %c0_0] : memref<32x128xf32, #tpu.memory_space<vmem>>, vector<32x128xf32>
    %c0_1 = arith.constant 0 : index
    %c0_2 = arith.constant 0 : index
    %1 = vector.load %arg2[%c0_1, %c0_2] : memref<32x128xf32, #tpu.memory_space<vmem>>, vector<32x128xf32>
    %2 = arith.addf %0, %1 : vector<32x128xf32>
    %c0_3 = arith.constant 0 : index
    %c0_4 = arith.constant 0 : index
    %3 = vector.load %arg3[%c0_3, %c0_4] : memref<32x128xf32, #tpu.memory_space<vmem>>, vector<32x128xf32>
    %4 = arith.addf %2, %3 : vector<32x128xf32>
    %c0_5 = arith.constant 0 : index
    %c0_6 = arith.constant 0 : index
    %5 = vector.load %arg4[%c0_5, %c0_6] : memref<1x128xf32, #tpu.memory_space<vmem>>, vector<1x128xf32>
    %c0_7 = arith.constant 0 : index
    %c0_8 = arith.constant 0 : index
    %6 = vector.load %arg5[%c0_7, %c0_8] : memref<1x128xf32, #tpu.memory_space<vmem>>, vector<1x128xf32>
    %cst = arith.constant dense<0.000000e+00> : vector<32xf32>
    %7 = vector.multi_reduction <add>, %4, %cst [1] : vector<32x128xf32> to vector<32xf32>
    %8 = vector.shape_cast %7 : vector<32xf32> to vector<32x1xf32>
    %cst_9 = arith.constant 1.280000e+02 : f32
    %9 = vector.broadcast %cst_9 : f32 to vector<32x1xf32>
    %10 = arith.divf %8, %9 : vector<32x1xf32>
    %11 = vector.broadcast %10 : vector<32x1xf32> to vector<32x128xf32>
    %12 = arith.subf %4, %11 : vector<32x128xf32>
    %13 = arith.mulf %12, %12 : vector<32x128xf32>
    %cst_10 = arith.constant dense<0.000000e+00> : vector<32xf32>
    %14 = vector.multi_reduction <add>, %13, %cst_10 [1] : vector<32x128xf32> to vector<32xf32>
    %15 = vector.shape_cast %14 : vector<32xf32> to vector<32x1xf32>
    %cst_11 = arith.constant 1.280000e+02 : f32
    %16 = vector.broadcast %cst_11 : f32 to vector<32x1xf32>
    %17 = arith.divf %15, %16 : vector<32x1xf32>
    %cst_12 = arith.constant 9.99999996E-13 : f32
    %18 = vector.broadcast %cst_12 : f32 to vector<32x1xf32>
    %19 = arith.addf %17, %18 : vector<32x1xf32>
    %20 = math.rsqrt %19 : vector<32x1xf32>
    %21 = vector.broadcast %20 : vector<32x1xf32> to vector<32x128xf32>
    %22 = arith.mulf %12, %21 : vector<32x128xf32>
    %23 = vector.broadcast %5 : vector<1x128xf32> to vector<32x128xf32>
    %24 = arith.mulf %23, %22 : vector<32x128xf32>
    %25 = vector.broadcast %6 : vector<1x128xf32> to vector<32x128xf32>
    %26 = arith.addf %24, %25 : vector<32x128xf32>
    %c0_13 = arith.constant 0 : index
    %c0_14 = arith.constant 0 : index
    %27 = vector.load %arg6[%c0_13, %c0_14] : memref<32x128xf32, #tpu.memory_space<vmem>>, vector<32x128xf32>
    tpu.vector_store %arg6[%c0_13, %c0_14], %26 {strides = array<i32>} : memref<32x128xf32, #tpu.memory_space<vmem>>, vector<32x128xf32>,
    return
  }
  func.func @transform_0(%arg0: i32) -> (i32, i32) {
    %c0_i32 = arith.constant 0 : i32
    %c0_i32_0 = arith.constant 0 : i32
    return %arg0, %c0_i32 : i32, i32
  }
  func.func @transform_1(%arg0: i32) -> (i32, i32) {
    %c0_i32 = arith.constant 0 : i32
    %c0_i32_0 = arith.constant 0 : i32
    return %arg0, %c0_i32 : i32, i32
  }
  func.func @transform_2(%arg0: i32) -> (i32, i32) {
    %c0_i32 = arith.constant 0 : i32
    %c0_i32_0 = arith.constant 0 : i32
    return %arg0, %c0_i32 : i32, i32
  }
  func.func @transform_3(%arg0: i32) -> (i32, i32) {
    %c0_i32 = arith.constant 0 : i32
    %c0_i32_0 = arith.constant 0 : i32
    %c0_i32_1 = arith.constant 0 : i32
    return %c0_i32, %c0_i32_0 : i32, i32
  }
  func.func @transform_4(%arg0: i32) -> (i32, i32) {
    %c0_i32 = arith.constant 0 : i32
    %c0_i32_0 = arith.constant 0 : i32
    %c0_i32_1 = arith.constant 0 : i32
    return %c0_i32, %c0_i32_0 : i32, i32
  }
  func.func @transform_5(%arg0: i32) -> (i32, i32) {
    %c0_i32 = arith.constant 0 : i32
    %c0_i32_0 = arith.constant 0 : i32
    return %arg0, %c0_i32 : i32, i32
  }
}

</mosaic_0001>

<llo_original>
// kernel: tpu_custom_call.1
$region0: #{tpu_custom_call.1}
  #allocation0 [shape = 'u32[]', space=smem, size = 0x4, offset = 0x4, fixed_abs, tag = 'smem constant byte address 0x4 - core index']
  #allocation1 [shape = 'u32[144,128]{1,0:T(1,128)}', space=vmem, size = 0x12000, scoped, tag = 'internal scratch']
  %s0 = inlined_call_operand.hbm [shape: f32[32,128], index: 0, kind: input, shape index: {}]
  %s1 = inlined_call_operand.hbm [shape: f32[32,128], index: 1, kind: input, shape index: {}]
  %s2 = inlined_call_operand.hbm [shape: f32[32,128], index: 2, kind: input, shape index: {}]
  %s3 = inlined_call_operand.vmem [shape: f32[1,128], index: 3, kind: input, shape index: {}]
  %s4 = inlined_call_operand.vmem [shape: f32[1,128], index: 4, kind: input, shape index: {}]
  %s5 = inlined_call_operand.hbm [shape: f32[32,128], index: 5, kind: output, shape index: {}]
  %s6 = sld [smem:[#allocation0]]
  $region42: #{tpu_custom_call.1} parent=0
    _
  %s8 = ssub.s32 1, %s6
  %s9 = scalar_select 0, %s8, %s6
  $region1: #{tpu_custom_call.1} parent=0
    #allocation2 [shape = 'u8[16384]{0}', space=vmem, size = 0x4000, scoped, tag = 'input window, operand 0, single buffered']
    #allocation3 [shape = 's32[1]{0}', space=sflag, size = 0x4, scoped, tag = 'scoped memory for tpu_custom_call.1']
    #allocation4 [shape = 's32[1]{0}', space=sflag, size = 0x4, scoped, tag = 'scoped memory for tpu_custom_call.1']
    #allocation5 [shape = 'u8[16384]{0}', space=vmem, size = 0x4000, scoped, tag = 'input window, operand 1, single buffered']
    #allocation6 [shape = 's32[1]{0}', space=sflag, size = 0x4, scoped, tag = 'scoped memory for tpu_custom_call.1']
    #allocation7 [shape = 'u8[16384]{0}', space=vmem, size = 0x4000, scoped, tag = 'input window, operand 2, single buffered']
    #allocation8 [shape = 'u8[16384]{0}', space=vmem, size = 0x4000, scoped, tag = 'output window, operand 0, single buffered']
    %10 = vsyncpa [#allocation3], 0
    %11 = vsyncpa [#allocation6], 0
    %12 = vsyncpa [#allocation4], 0
    // Predicated region
    $region2: #{tpu_custom_call.1} parent=1 // pred_check
      _
    $region3: #{tpu_custom_call.1} parent=1 // pred_check_branch
      %14 = sbr.rel (0) target = $region5
    $region4: #{tpu_custom_call.1} parent=1 // pred_region
      %s16 = ssub.s32 512, 512
      %17 = vsyncadd [#allocation3], %s16
      %s18 = sshll.u32 [#allocation2], 4
      %s19 = int_to_ptr.vmem [resolvable:$true] %s18
      %24 = dma.hbm_to_vmem [thread:$0]  %s0, 512, %s19, [#allocation3], 128, 128, 8
    $region5: #{tpu_custom_call.1} parent=1 // pred_fallthru
      _
    // Predicated region
    $region6: #{tpu_custom_call.1} parent=1 // pred_check
      _
    $region7: #{tpu_custom_call.1} parent=1 // pred_check_branch
      %26 = sbr.rel (0) target = $region9
    $region8: #{tpu_custom_call.1} parent=1 // pred_region
      %s28 = ssub.s32 512, 512
      %29 = vsyncadd [#allocation6], %s28
      %s30 = sshll.u32 [#allocation5], 4
      %s31 = int_to_ptr.vmem [resolvable:$true] %s30
      %36 = dma.hbm_to_vmem [thread:$0]  %s1, 512, %s31, [#allocation6], 128, 128, 8
    $region9: #{tpu_custom_call.1} parent=1 // pred_fallthru
      _
    // Predicated region
    $region10: #{tpu_custom_call.1} parent=1 // pred_check
      _
    $region11: #{tpu_custom_call.1} parent=1 // pred_check_branch
      %38 = sbr.rel (0) target = $region13
    $region12: #{tpu_custom_call.1} parent=1 // pred_region
      %s40 = ssub.s32 512, 512
      %41 = vsyncadd [#allocation6], %s40
      %s42 = sshll.u32 [#allocation7], 4
      %s43 = int_to_ptr.vmem [resolvable:$true] %s42
      %48 = dma.hbm_to_vmem [thread:$0]  %s2, 512, %s43, [#allocation6], 128, 128, 8
    $region13: #{tpu_custom_call.1} parent=1 // pred_fallthru
      _
    // Predicated region
    $region14: #{tpu_custom_call.1} parent=1 // pred_check
      _
    $region15: #{tpu_custom_call.1} parent=1 // pred_check_branch
      %50 = sbr.rel (0) target = $region17
    $region16: #{tpu_custom_call.1} parent=1 // pred_region
      _
    $region17: #{tpu_custom_call.1} parent=1 // pred_fallthru
      _
    // Predicated region
    $region18: #{tpu_custom_call.1} parent=1 // pred_check
      _
    $region19: #{tpu_custom_call.1} parent=1 // pred_check_branch
      %52 = sbr.rel (0) target = $region21
    $region20: #{tpu_custom_call.1} parent=1 // pred_region
      _
    $region21: #{tpu_custom_call.1} parent=1 // pred_fallthru
      _
    // Predicated region
    $region22: #{tpu_custom_call.1} parent=1 // pred_check
      _
    $region23: #{tpu_custom_call.1} parent=1 // pred_check_branch
      %54 = sbr.rel (0) target = $region25
    $region24: #{tpu_custom_call.1} parent=1 // pred_region
      %55 = dma.done [#allocation3], 512
    $region25: #{tpu_custom_call.1} parent=1 // pred_fallthru
      _
    // Predicated region
    $region26: #{tpu_custom_call.1} parent=1 // pred_check
      _
    $region27: #{tpu_custom_call.1} parent=1 // pred_check_branch
      %57 = sbr.rel (0) target = $region29
    $region28: #{tpu_custom_call.1} parent=1 // pred_region
      %58 = dma.done [#allocation6], 512
    $region29: #{tpu_custom_call.1} parent=1 // pred_fallthru
      _
    // Predicated region
    $region30: #{tpu_custom_call.1} parent=1 // pred_check
      _
    $region31: #{tpu_custom_call.1} parent=1 // pred_check_branch
      %60 = sbr.rel (0) target = $region33
    $region32: #{tpu_custom_call.1} parent=1 // pred_region
      %61 = dma.done [#allocation6], 512
    $region33: #{tpu_custom_call.1} parent=1 // pred_fallthru
      _
    %v62 = vld [vmem:[#allocation2] sm:$0xff]
    %v63 = vld [vmem:[#allocation2 + $0x8] sm:$0xff]
    %v64 = vld [vmem:[#allocation2 + $0x10] sm:$0xff]
    %v65 = vld [vmem:[#allocation2 + $0x18] sm:$0xff]
    %v66 = vld [vmem:[#allocation5] sm:$0xff]
    %v67 = vld [vmem:[#allocation5 + $0x8] sm:$0xff]
    %v68 = vld [vmem:[#allocation5 + $0x10] sm:$0xff]
    %v69 = vld [vmem:[#allocation5 + $0x18] sm:$0xff]
    %v70 = vadd.f32 %v62, %v66
    %v71 = vadd.f32 %v63, %v67
    %v72 = vadd.f32 %v64, %v68
    %v73 = vadd.f32 %v65, %v69
    %v74 = vld [vmem:[#allocation7] sm:$0xff]
    %v75 = vld [vmem:[#allocation7 + $0x8] sm:$0xff]
    %v76 = vld [vmem:[#allocation7 + $0x10] sm:$0xff]
    %v77 = vld [vmem:[#allocation7 + $0x18] sm:$0xff]
    %v78 = vadd.f32 %v70, %v74
    %v79 = vadd.f32 %v71, %v75
    %v80 = vadd.f32 %v72, %v76
    %v81 = vadd.f32 %v73, %v77
    %v82 = vld [vmem:[%s3] sm:$0x1]
    %v83 = vld [vmem:[%s4] sm:$0x1]
    %84 = vadd.xlane.f32.xlu0 %v78
    %v85 = vpop.xlane.xlu0 %84
    %86 = vadd.xlane.f32.xlu0 %v79
    %v87 = vpop.xlane.xlu0 %86
    %88 = vadd.xlane.f32.xlu0 %v80
    %v89 = vpop.xlane.xlu0 %88
    %90 = vadd.xlane.f32.xlu0 %v81
    %v91 = vpop.xlane.xlu0 %90
    %v92 = vrcp.pop 128.0
    %v93 = vmul.f32 %v85, %v92
    %v94 = vmul.f32 %v87, %v92
    %v95 = vmul.f32 %v89, %v92
    %v96 = vmul.f32 %v91, %v92
    %v97 = vsub.f32 %v78, %v93
    %v98 = vsub.f32 %v79, %v94
    %v99 = vsub.f32 %v80, %v95
    %v100 = vsub.f32 %v81, %v96
    %v101 = vmul.f32 %v97, %v97
    %v102 = vmul.f32 %v98, %v98
    %v103 = vmul.f32 %v99, %v99
    %v104 = vmul.f32 %v100, %v100
    %105 = vadd.xlane.f32.xlu0 %v101
    %v106 = vpop.xlane.xlu0 %105
    %107 = vadd.xlane.f32.xlu0 %v102
    %v108 = vpop.xlane.xlu0 %107
    %109 = vadd.xlane.f32.xlu0 %v103
    %v110 = vpop.xlane.xlu0 %109
    %111 = vadd.xlane.f32.xlu0 %v104
    %v112 = vpop.xlane.xlu0 %111
    %v113 = vmul.f32 %v106, %v92
    %v114 = vmul.f32 %v108, %v92
    %v115 = vmul.f32 %v110, %v92
    %v116 = vmul.f32 %v112, %v92
    %v117 = vadd.f32 %v113, 1e-12
    %v118 = vadd.f32 %v114, 1e-12
    %v119 = vadd.f32 %v115, 1e-12
    %v120 = vadd.f32 %v116, 1e-12
    %v121 = vrsqrt.pop %v117
    %v122 = vrsqrt.pop %v118
    %v123 = vrsqrt.pop %v119
    %v124 = vrsqrt.pop %v120
    %v125 = vmul.f32 %v97, %v121
    %v126 = vmul.f32 %v98, %v122
    %v127 = vmul.f32 %v99, %v123
    %v128 = vmul.f32 %v100, %v124
    %v130 = vlaneseq
    %v131 = vshrl.u32 %v130, 7
    %v132 = vsub.s32 0, %v131
    %v133 = vrot.slane %v82, %v132
    %v135 = vmul.f32 %v133, %v125
    %v136 = vmul.f32 %v133, %v126
    %v137 = vmul.f32 %v133, %v127
    %v138 = vmul.f32 %v133, %v128
    %v140 = vlaneseq
    %v141 = vshrl.u32 %v140, 7
    %v142 = vsub.s32 0, %v141
    %v143 = vrot.slane %v83, %v142
    %v145 = vadd.f32 %v135, %v143
    %v146 = vadd.f32 %v136, %v143
    %v147 = vadd.f32 %v137, %v143
    %v148 = vadd.f32 %v138, %v143
    %149 = vst [vmem:[#allocation8] sm:$0xff] %v145
    %150 = vst [vmem:[#allocation8 + $0x8] sm:$0xff] %v146
    %151 = vst [vmem:[#allocation8 + $0x10] sm:$0xff] %v147
    %152 = vst [vmem:[#allocation8 + $0x18] sm:$0xff] %v148
    // Predicated region
    $region34: #{tpu_custom_call.1} parent=1 // pred_check
      _
    $region35: #{tpu_custom_call.1} parent=1 // pred_check_branch
      %154 = sbr.rel (0) target = $region37
    $region36: #{tpu_custom_call.1} parent=1 // pred_region
      %s156 = ssub.s32 512, 512
      %157 = vsyncadd [#allocation4], %s156
      %s158 = sshll.u32 [#allocation8], 4
      %s159 = int_to_ptr.vmem [resolvable:$true] %s158
      %164 = dma.vmem_to_hbm [thread:$0]  %s159, 512, %s5, [#allocation4], 128, 128, 8
    $region37: #{tpu_custom_call.1} parent=1 // pred_fallthru
      _
    // Predicated region
    $region38: #{tpu_custom_call.1} parent=1 // pred_check
      _
    $region39: #{tpu_custom_call.1} parent=1 // pred_check_branch
      %166 = sbr.rel (0) target = $region41
    $region40: #{tpu_custom_call.1} parent=1 // pred_region
      %167 = dma.done [#allocation4], 512
    $region41: #{tpu_custom_call.1} parent=1 // pred_fallthru
      _
    %168 = vsyncpa [#allocation3], 1
    %169 = vsyncpa [#allocation6], 1
    %170 = vsyncpa [#allocation4], 1

</llo_original>
